<compile_context>
chip_gen: v5e
topology: v5e:2x2
jax: 0.10.0
libtpu: 0.0.40
codegen_flags: <defaults>
</compile_context>

<pallas_src>
import jax
import jax.numpy as jnp
from jax.experimental import pallas as pl
from jax.experimental.pallas import tpu as pltpu

EPS = 1e-5  # PyTorch BatchNorm2d default eps


def _banded_reflect_weights(w, W):
    """PyTorch conv weight (Cout, Cin, 3, 3) -> 3 banded matrices
    (3, W*Cin, W*Cout), one per dy row-tap, with the dx column taps AND the
    ReflectionPad(1) *column* padding folded in.  With these, the 3x3 conv of
    the row-reflection-padded, lane-flattened activation xp (H+2, W*Cin) is
        out = sum_dy  xp[dy:dy+H, :] @ Wdy            # (H, W*Cout)
    i.e. only lane-aligned matmuls, no lane-shifted window slices."""
    Cout, Cin = w.shape[0], w.shape[1]
    wk = jnp.transpose(w, (2, 3, 1, 0))                      # (dy, dx, Cin, Cout)
    a = jnp.arange(W + 2)                                    # padded column index
    # reflection map: padded column a reads interior column src(a)
    src = jnp.where(a == 0, 1, jnp.where(a == W + 1, W - 2, a - 1))
    wcols = jnp.arange(W)
    # hit[a, dx, w] = 1 iff output column w, tap dx reads padded column a
    hit = (a[:, None, None] == wcols[None, None, :] + jnp.arange(3)[None, :, None])
    # src1h[a, s] = 1 iff padded column a is interior column s
    src1h = (src[:, None] == wcols[None, :])
    sel = jnp.einsum("adw,as->sdw", hit.astype(w.dtype), src1h.astype(w.dtype))
    bd = jnp.einsum("sdw,ydio->ysiwo", sel, wk)              # (3, W, Cin, W, Cout)
    return bd.reshape(3, W * Cin, W * Cout).astype(jnp.bfloat16)


def _make_double_conv_kernel(N, H, W, Cin, Cout):
    WCo = W * Cout

    def conv3x3(xr, w_ref):
        # xr: (H, W*C) bf16, *unpadded* rows.  Reflection row padding is one
        # cheap sublane concat; column padding is folded into w_ref already.
        xp = jnp.concatenate([xr[1:2], xr, xr[H - 2:H - 1]], axis=0)   # (H+2, W*C)
        acc = jnp.dot(xp[0:H], w_ref[0], preferred_element_type=jnp.float32)
        acc = acc + jnp.dot(xp[1:H + 1], w_ref[1], preferred_element_type=jnp.float32)
        acc = acc + jnp.dot(xp[2:H + 2], w_ref[2], preferred_element_type=jnp.float32)
        return acc                                                     # (H, W*Cout) f32

    def batch_stats(acts):
        # per-lane sums over (batch, H); lane layout is w*Cout + c
        s = acts[0].sum(axis=0, keepdims=True)
        q = (acts[0] * acts[0]).sum(axis=0, keepdims=True)
        for a in acts[1:]:
            s = s + a.sum(axis=0, keepdims=True)
            q = q + (a * a).sum(axis=0, keepdims=True)
        return s, q                                                    # (1, W*Cout) f32 each

    def bn_fold(s, q, avg_ref, g_ref, b_ref):
        # avg_ref collapses the W lane-groups per channel and divides by
        # N*H*W, giving mean / E[x^2] already tiled per lane.
        mean = jnp.dot(s, avg_ref[...], preferred_element_type=jnp.float32)
        ex2 = jnp.dot(q, avg_ref[...], preferred_element_type=jnp.float32)
        var = jnp.maximum(ex2 - mean * mean, 0.0)   # clamp: E[x^2]-E[x]^2 can dip negative
        scale = g_ref[...] * jax.lax.rsqrt(var + EPS)                  # EUP
        shift = b_ref[...] - mean * scale
        return scale, shift

    def kernel(x_ref, w1_ref, w2_ref, avg_ref, g1_ref, b1_ref, g2_ref, b2_ref, o_ref):
        # ---- layer 1: conv over the whole VMEM-resident batch ----
        a1 = [conv3x3(x_ref[n], w1_ref) for n in range(N)]
        s1, q1 = batch_stats(a1)
        scale1, shift1 = bn_fold(s1, q1, avg_ref, g1_ref, b1_ref)

        # ---- BN1 + ReLU (applied once, hoisted out of the tap loop) -> layer 2 conv ----
        a2 = []
        for n in range(N):
            act = jnp.maximum(a1[n] * scale1 + shift1, 0.0).astype(jnp.bfloat16)
            a2.append(conv3x3(act, w2_ref))
        s2, q2 = batch_stats(a2)
        scale2, shift2 = bn_fold(s2, q2, avg_ref, g2_ref, b2_ref)

        # ---- BN2 + ReLU epilogue, lane-dense (128-wide) unmasked stores ----
        for n in range(N):
            o_ref[n] = jnp.maximum(a2[n] * scale2 + shift2, 0.0)

    return kernel


def inconv_forward(x_nchw, params):
    """inconv.forward: (N, in_ch, H, W) -> (N, out_ch, H, W), BatchNorm in training mode."""
    N, Cin, H, W = x_nchw.shape
    Cout = params["w1"].shape[0]
    WCo = W * Cout

    # NCHW -> NHWC, lane-flattened (lane = w*Cin + c), bf16 for the MXU.
    x = jnp.transpose(x_nchw, (0, 2, 3, 1)).reshape(N, H, W * Cin).astype(jnp.bfloat16)

    w1 = _banded_reflect_weights(params["w1"], W)   # (3, W*Cin,  W*Cout) bf16
    w2 = _banded_reflect_weights(params["w2"], W)   # (3, W*Cout, W*Cout) bf16
    # per-channel averaging matrix: collapses the W lane groups, divides by N*H*W
    avg = jnp.tile(jnp.eye(Cout, dtype=jnp.float32), (W, W)) / float(N * H * W)
    # gamma/beta tiled over W to match the lane-flattened layout
    g1 = jnp.tile(params["g1"], W).reshape(1, WCo).astype(jnp.float32)
    b1 = jnp.tile(params["be1"], W).reshape(1, WCo).astype(jnp.float32)
    g2 = jnp.tile(params["g2"], W).reshape(1, WCo).astype(jnp.float32)
    b2 = jnp.tile(params["be2"], W).reshape(1, WCo).astype(jnp.float32)
    # (conv biases params["b1"]/["b2"] intentionally unused: a per-channel bias
    #  immediately followed by train-mode BatchNorm cancels exactly.)

    kernel = _make_double_conv_kernel(N, H, W, Cin, Cout)

    y = pl.pallas_call(
        kernel,
        out_shape=jax.ShapeDtypeStruct((N, H, WCo), jnp.float32),
        grid_spec=pltpu.PrefetchScalarGridSpec(
            num_scalar_prefetch=0,
            grid=(1,),    # everything fits VMEM -> single grid step, zero re-streaming
            in_specs=[
                pl.BlockSpec((N, H, W * Cin), lambda i: (0, 0, 0)),
                pl.BlockSpec((3, W * Cin, WCo), lambda i: (0, 0, 0)),
                pl.BlockSpec((3, WCo, WCo), lambda i: (0, 0, 0)),
                pl.BlockSpec((WCo, WCo), lambda i: (0, 0)),
                pl.BlockSpec((1, WCo), lambda i: (0, 0)),
                pl.BlockSpec((1, WCo), lambda i: (0, 0)),
                pl.BlockSpec((1, WCo), lambda i: (0, 0)),
                pl.BlockSpec((1, WCo), lambda i: (0, 0)),
            ],
            out_specs=pl.BlockSpec((N, H, WCo), lambda i: (0, 0, 0)),
        ),
        compiler_params=pltpu.CompilerParams(
            dimension_semantics=("arbitrary",)),
    )(x, w1, w2, avg, g1, b1, g2, b2)

    y = y.reshape(N, H, W, Cout)
    return jnp.transpose(y, (0, 3, 1, 2))               # NHWC -> NCHW


def init_params(key, in_ch, out_ch):
    """Deterministic synthetic parameters, matching nn.Conv2d / nn.BatchNorm2d shapes."""
    k1, k2 = jax.random.split(key)

    def conv_init(k, cout, cin):
        fan_in = cin * 9
        bound = 1.0 / jnp.sqrt(float(fan_in))
        kw, kb = jax.random.split(k)
        w = jax.random.uniform(kw, (cout, cin, 3, 3), jnp.float32, -bound, bound)
        b = jax.random.uniform(kb, (cout,), jnp.float32, -bound, bound)
        return w, b

    w1, b1 = conv_init(k1, out_ch, in_ch)
    w2, b2 = conv_init(k2, out_ch, out_ch)
    return dict(
        w1=w1, b1=b1, g1=jnp.ones((out_ch,), jnp.float32), be1=jnp.zeros((out_ch,), jnp.float32),
        w2=w2, b2=b2, g2=jnp.ones((out_ch,), jnp.float32), be2=jnp.zeros((out_ch,), jnp.float32),
    )


if __name__ == "__main__":
    key = jax.random.PRNGKey(0)
    kx, kp = jax.random.split(key)
    in_ch, out_ch = 4, 8
    x = jax.random.normal(kx, (2, in_ch, 16, 16), jnp.float32)   # NCHW like PyTorch
    params = init_params(kp, in_ch, out_ch)

    y = jax.jit(inconv_forward)(x, params)
    jax.block_until_ready(y)
    assert y.shape == (2, out_ch, 16, 16)
    assert bool(jnp.all(jnp.isfinite(y)))
    assert bool(jnp.all(y >= 0.0))   # ReLU output
    print("KERNEL_OK")
</pallas_src>

<mosaic_0001>
module attributes {stable_mosaic.version = 11 : i64} {
  func.func @kernel(%arg0: i32, %arg1: memref<2x16x64xbf16, #tpu.memory_space<vmem>>, %arg2: memref<3x64x128xbf16, #tpu.memory_space<vmem>>, %arg3: memref<3x128x128xbf16, #tpu.memory_space<vmem>>, %arg4: memref<128x128xf32, #tpu.memory_space<vmem>>, %arg5: memref<1x128xf32, #tpu.memory_space<vmem>>, %arg6: memref<1x128xf32, #tpu.memory_space<vmem>>, %arg7: memref<1x128xf32, #tpu.memory_space<vmem>>, %arg8: memref<1x128xf32, #tpu.memory_space<vmem>>, %arg9: memref<2x16x128xf32, #tpu.memory_space<vmem>>) attributes {dimension_semantics = [#tpu.dimension_semantics<arbitrary>], iteration_bounds = array<i64: 1>, scalar_prefetch = 0 : i64, scratch_operands = 0 : i64, tpu.core_type = #tpu.core_type<tc>, window_params = [{pipeline_mode = #tpu.pipeline_mode<synchronous>, transform_indices = @transform_0, window_bounds = array<i64: 2, 16, 64>}, {pipeline_mode = #tpu.pipeline_mode<synchronous>, transform_indices = @transform_1, window_bounds = array<i64: 3, 64, 128>}, {pipeline_mode = #tpu.pipeline_mode<synchronous>, transform_indices = @transform_2, window_bounds = array<i64: 3, 128, 128>}, {pipeline_mode = #tpu.pipeline_mode<synchronous>, transform_indices = @transform_3, window_bounds = array<i64: 128, 128>}, {pipeline_mode = #tpu.pipeline_mode<synchronous>, transform_indices = @transform_4, window_bounds = array<i64: 1, 128>}, {pipeline_mode = #tpu.pipeline_mode<synchronous>, transform_indices = @transform_5, window_bounds = array<i64: 1, 128>}, {pipeline_mode = #tpu.pipeline_mode<synchronous>, transform_indices = @transform_6, window_bounds = array<i64: 1, 128>}, {pipeline_mode = #tpu.pipeline_mode<synchronous>, transform_indices = @transform_7, window_bounds = array<i64: 1, 128>}, {pipeline_mode = #tpu.pipeline_mode<synchronous>, transform_indices = @transform_8, window_bounds = array<i64: 2, 16, 128>}]} {
    %c0 = arith.constant 0 : index
    %c0_0 = arith.constant 0 : index
    %c0_1 = arith.constant 0 : index
    %0 = vector.load %arg1[%c0, %c0_0, %c0_1] : memref<2x16x64xbf16, #tpu.memory_space<vmem>>, vector<1x16x64xbf16>
    %1 = vector.shape_cast %0 : vector<1x16x64xbf16> to vector<16x64xbf16>
    %2 = vector.extract_strided_slice %1 {offsets = [1, 0], sizes = [1, 64], strides = [1, 1]} : vector<16x64xbf16> to vector<1x64xbf16>
    %3 = vector.extract_strided_slice %1 {offsets = [14, 0], sizes = [1, 64], strides = [1, 1]} : vector<16x64xbf16> to vector<1x64xbf16>
    %4 = tpu.concatenate %2, %1, %3 in 0 : vector<1x64xbf16>, vector<16x64xbf16>, vector<1x64xbf16> -> vector<18x64xbf16>
    %5 = vector.extract_strided_slice %4 {offsets = [0, 0], sizes = [16, 64], strides = [1, 1]} : vector<18x64xbf16> to vector<16x64xbf16>
    %c0_2 = arith.constant 0 : index
    %c0_3 = arith.constant 0 : index
    %c0_4 = arith.constant 0 : index
    %6 = vector.load %arg2[%c0_2, %c0_3, %c0_4] : memref<3x64x128xbf16, #tpu.memory_space<vmem>>, vector<1x64x128xbf16>
    %7 = vector.shape_cast %6 : vector<1x64x128xbf16> to vector<64x128xbf16>
    %cst = arith.constant dense<0.000000e+00> : vector<16x128xf32>
    %8 = tpu.matmul %5, %7, %cst {dimension_numbers = #tpu.dot_dimension_numbers<[1], [0], [0], [1], [0, 0, 1, 1], [], []>} : vector<16x64xbf16>, vector<64x128xbf16>, vector<16x128xf32> -> vector<16x128xf32>
    %9 = vector.extract_strided_slice %4 {offsets = [1, 0], sizes = [16, 64], strides = [1, 1]} : vector<18x64xbf16> to vector<16x64xbf16>
    %c1 = arith.constant 1 : index
    %c0_5 = arith.constant 0 : index
    %c0_6 = arith.constant 0 : index
    %10 = vector.load %arg2[%c1, %c0_5, %c0_6] : memref<3x64x128xbf16, #tpu.memory_space<vmem>>, vector<1x64x128xbf16>
    %11 = vector.shape_cast %10 : vector<1x64x128xbf16> to vector<64x128xbf16>
    %cst_7 = arith.constant dense<0.000000e+00> : vector<16x128xf32>
    %12 = tpu.matmul %9, %11, %cst_7 {dimension_numbers = #tpu.dot_dimension_numbers<[1], [0], [0], [1], [0, 0, 1, 1], [], []>} : vector<16x64xbf16>, vector<64x128xbf16>, vector<16x128xf32> -> vector<16x128xf32>
    %13 = arith.addf %8, %12 : vector<16x128xf32>
    %14 = vector.extract_strided_slice %4 {offsets = [2, 0], sizes = [16, 64], strides = [1, 1]} : vector<18x64xbf16> to vector<16x64xbf16>
    %c2 = arith.constant 2 : index
    %c0_8 = arith.constant 0 : index
    %c0_9 = arith.constant 0 : index
    %15 = vector.load %arg2[%c2, %c0_8, %c0_9] : memref<3x64x128xbf16, #tpu.memory_space<vmem>>, vector<1x64x128xbf16>
    %16 = vector.shape_cast %15 : vector<1x64x128xbf16> to vector<64x128xbf16>
    %cst_10 = arith.constant dense<0.000000e+00> : vector<16x128xf32>
    %17 = tpu.matmul %14, %16, %cst_10 {dimension_numbers = #tpu.dot_dimension_numbers<[1], [0], [0], [1], [0, 0, 1, 1], [], []>} : vector<16x64xbf16>, vector<64x128xbf16>, vector<16x128xf32> -> vector<16x128xf32>
    %18 = arith.addf %13, %17 : vector<16x128xf32>
    %c1_11 = arith.constant 1 : index
    %c0_12 = arith.constant 0 : index
    %c0_13 = arith.constant 0 : index
    %19 = vector.load %arg1[%c1_11, %c0_12, %c0_13] : memref<2x16x64xbf16, #tpu.memory_space<vmem>>, vector<1x16x64xbf16>
    %20 = vector.shape_cast %19 : vector<1x16x64xbf16> to vector<16x64xbf16>
    %21 = vector.extract_strided_slice %20 {offsets = [1, 0], sizes = [1, 64], strides = [1, 1]} : vector<16x64xbf16> to vector<1x64xbf16>
    %22 = vector.extract_strided_slice %20 {offsets = [14, 0], sizes = [1, 64], strides = [1, 1]} : vector<16x64xbf16> to vector<1x64xbf16>
    %23 = tpu.concatenate %21, %20, %22 in 0 : vector<1x64xbf16>, vector<16x64xbf16>, vector<1x64xbf16> -> vector<18x64xbf16>
    %24 = vector.extract_strided_slice %23 {offsets = [0, 0], sizes = [16, 64], strides = [1, 1]} : vector<18x64xbf16> to vector<16x64xbf16>
    %c0_14 = arith.constant 0 : index
    %c0_15 = arith.constant 0 : index
    %c0_16 = arith.constant 0 : index
    %25 = vector.load %arg2[%c0_14, %c0_15, %c0_16] : memref<3x64x128xbf16, #tpu.memory_space<vmem>>, vector<1x64x128xbf16>
    %26 = vector.shape_cast %25 : vector<1x64x128xbf16> to vector<64x128xbf16>
    %cst_17 = arith.constant dense<0.000000e+00> : vector<16x128xf32>
    %27 = tpu.matmul %24, %26, %cst_17 {dimension_numbers = #tpu.dot_dimension_numbers<[1], [0], [0], [1], [0, 0, 1, 1], [], []>} : vector<16x64xbf16>, vector<64x128xbf16>, vector<16x128xf32> -> vector<16x128xf32>
    %28 = vector.extract_strided_slice %23 {offsets = [1, 0], sizes = [16, 64], strides = [1, 1]} : vector<18x64xbf16> to vector<16x64xbf16>
    %c1_18 = arith.constant 1 : index
    %c0_19 = arith.constant 0 : index
    %c0_20 = arith.constant 0 : index
    %29 = vector.load %arg2[%c1_18, %c0_19, %c0_20] : memref<3x64x128xbf16, #tpu.memory_space<vmem>>, vector<1x64x128xbf16>
    %30 = vector.shape_cast %29 : vector<1x64x128xbf16> to vector<64x128xbf16>
    %cst_21 = arith.constant dense<0.000000e+00> : vector<16x128xf32>
    %31 = tpu.matmul %28, %30, %cst_21 {dimension_numbers = #tpu.dot_dimension_numbers<[1], [0], [0], [1], [0, 0, 1, 1], [], []>} : vector<16x64xbf16>, vector<64x128xbf16>, vector<16x128xf32> -> vector<16x128xf32>
    %32 = arith.addf %27, %31 : vector<16x128xf32>
    %33 = vector.extract_strided_slice %23 {offsets = [2, 0], sizes = [16, 64], strides = [1, 1]} : vector<18x64xbf16> to vector<16x64xbf16>
    %c2_22 = arith.constant 2 : index
    %c0_23 = arith.constant 0 : index
    %c0_24 = arith.constant 0 : index
    %34 = vector.load %arg2[%c2_22, %c0_23, %c0_24] : memref<3x64x128xbf16, #tpu.memory_space<vmem>>, vector<1x64x128xbf16>
    %35 = vector.shape_cast %34 : vector<1x64x128xbf16> to vector<64x128xbf16>
    %cst_25 = arith.constant dense<0.000000e+00> : vector<16x128xf32>
    %36 = tpu.matmul %33, %35, %cst_25 {dimension_numbers = #tpu.dot_dimension_numbers<[1], [0], [0], [1], [0, 0, 1, 1], [], []>} : vector<16x64xbf16>, vector<64x128xbf16>, vector<16x128xf32> -> vector<16x128xf32>
    %37 = arith.addf %32, %36 : vector<16x128xf32>
    %cst_26 = arith.constant dense<0.000000e+00> : vector<128xf32>
    %38 = vector.multi_reduction <add>, %18, %cst_26 [0] : vector<16x128xf32> to vector<128xf32>
    %39 = vector.shape_cast %38 : vector<128xf32> to vector<1x128xf32>
    %40 = arith.mulf %18, %18 : vector<16x128xf32>
    %cst_27 = arith.constant dense<0.000000e+00> : vector<128xf32>
    %41 = vector.multi_reduction <add>, %40, %cst_27 [0] : vector<16x128xf32> to vector<128xf32>
    %42 = vector.shape_cast %41 : vector<128xf32> to vector<1x128xf32>
    %cst_28 = arith.constant dense<0.000000e+00> : vector<128xf32>
    %43 = vector.multi_reduction <add>, %37, %cst_28 [0] : vector<16x128xf32> to vector<128xf32>
    %44 = vector.shape_cast %43 : vector<128xf32> to vector<1x128xf32>
    %45 = arith.addf %39, %44 : vector<1x128xf32>
    %46 = arith.mulf %37, %37 : vector<16x128xf32>
    %cst_29 = arith.constant dense<0.000000e+00> : vector<128xf32>
    %47 = vector.multi_reduction <add>, %46, %cst_29 [0] : vector<16x128xf32> to vector<128xf32>
    %48 = vector.shape_cast %47 : vector<128xf32> to vector<1x128xf32>
    %49 = arith.addf %42, %48 : vector<1x128xf32>
    %c0_30 = arith.constant 0 : index
    %c0_31 = arith.constant 0 : index
    %50 = vector.load %arg4[%c0_30, %c0_31] : memref<128x128xf32, #tpu.memory_space<vmem>>, vector<128x128xf32>
    %cst_32 = arith.constant dense<0.000000e+00> : vector<1x128xf32>
    %51 = tpu.matmul %45, %50, %cst_32 {dimension_numbers = #tpu.dot_dimension_numbers<[1], [0], [0], [1], [0, 0, 1, 1], [], []>} : vector<1x128xf32>, vector<128x128xf32>, vector<1x128xf32> -> vector<1x128xf32>
    %c0_33 = arith.constant 0 : index
    %c0_34 = arith.constant 0 : index
    %52 = vector.load %arg4[%c0_33, %c0_34] : memref<128x128xf32, #tpu.memory_space<vmem>>, vector<128x128xf32>
    %cst_35 = arith.constant dense<0.000000e+00> : vector<1x128xf32>
    %53 = tpu.matmul %49, %52, %cst_35 {dimension_numbers = #tpu.dot_dimension_numbers<[1], [0], [0], [1], [0, 0, 1, 1], [], []>} : vector<1x128xf32>, vector<128x128xf32>, vector<1x128xf32> -> vector<1x128xf32>
    %54 = arith.mulf %51, %51 : vector<1x128xf32>
    %55 = arith.subf %53, %54 : vector<1x128xf32>
    %cst_36 = arith.constant 0.000000e+00 : f32
    %56 = vector.broadcast %cst_36 : f32 to vector<1x128xf32>
    %57 = arith.maximumf %55, %56 : vector<1x128xf32>
    %c0_37 = arith.constant 0 : index
    %c0_38 = arith.constant 0 : index
    %58 = vector.load %arg5[%c0_37, %c0_38] : memref<1x128xf32, #tpu.memory_space<vmem>>, vector<1x128xf32>
    %cst_39 = arith.constant 9.99999974E-6 : f32
    %59 = vector.broadcast %cst_39 : f32 to vector<1x128xf32>
    %60 = arith.addf %57, %59 : vector<1x128xf32>
    %61 = math.rsqrt %60 : vector<1x128xf32>
    %62 = arith.mulf %58, %61 : vector<1x128xf32>
    %c0_40 = arith.constant 0 : index
    %c0_41 = arith.constant 0 : index
    %63 = vector.load %arg6[%c0_40, %c0_41] : memref<1x128xf32, #tpu.memory_space<vmem>>, vector<1x128xf32>
    %64 = arith.mulf %51, %62 : vector<1x128xf32>
    %65 = arith.subf %63, %64 : vector<1x128xf32>
    %66 = vector.broadcast %62 : vector<1x128xf32> to vector<16x128xf32>
    %67 = arith.mulf %18, %66 : vector<16x128xf32>
    %68 = vector.broadcast %65 : vector<1x128xf32> to vector<16x128xf32>
    %69 = arith.addf %67, %68 : vector<16x128xf32>
    %cst_42 = arith.constant 0.000000e+00 : f32
    %70 = vector.broadcast %cst_42 : f32 to vector<16x128xf32>
    %71 = arith.maximumf %69, %70 : vector<16x128xf32>
    %72 = arith.truncf %71 : vector<16x128xf32> to vector<16x128xbf16>
    %73 = vector.extract_strided_slice %72 {offsets = [1, 0], sizes = [1, 128], strides = [1, 1]} : vector<16x128xbf16> to vector<1x128xbf16>
    %74 = vector.extract_strided_slice %72 {offsets = [14, 0], sizes = [1, 128], strides = [1, 1]} : vector<16x128xbf16> to vector<1x128xbf16>
    %75 = tpu.concatenate %73, %72, %74 in 0 : vector<1x128xbf16>, vector<16x128xbf16>, vector<1x128xbf16> -> vector<18x128xbf16>
    %76 = vector.extract_strided_slice %75 {offsets = [0, 0], sizes = [16, 128], strides = [1, 1]} : vector<18x128xbf16> to vector<16x128xbf16>
    %c0_43 = arith.constant 0 : index
    %c0_44 = arith.constant 0 : index
    %c0_45 = arith.constant 0 : index
    %77 = vector.load %arg3[%c0_43, %c0_44, %c0_45] : memref<3x128x128xbf16, #tpu.memory_space<vmem>>, vector<1x128x128xbf16>
    %78 = vector.shape_cast %77 : vector<1x128x128xbf16> to vector<128x128xbf16>
    %cst_46 = arith.constant dense<0.000000e+00> : vector<16x128xf32>
    %79 = tpu.matmul %76, %78, %cst_46 {dimension_numbers = #tpu.dot_dimension_numbers<[1], [0], [0], [1], [0, 0, 1, 1], [], []>} : vector<16x128xbf16>, vector<128x128xbf16>, vector<16x128xf32> -> vector<16x128xf32>
    %80 = vector.extract_strided_slice %75 {offsets = [1, 0], sizes = [16, 128], strides = [1, 1]} : vector<18x128xbf16> to vector<16x128xbf16>
    %c1_47 = arith.constant 1 : index
    %c0_48 = arith.constant 0 : index
    %c0_49 = arith.constant 0 : index
    %81 = vector.load %arg3[%c1_47, %c0_48, %c0_49] : memref<3x128x128xbf16, #tpu.memory_space<vmem>>, vector<1x128x128xbf16>
    %82 = vector.shape_cast %81 : vector<1x128x128xbf16> to vector<128x128xbf16>
    %cst_50 = arith.constant dense<0.000000e+00> : vector<16x128xf32>
    %83 = tpu.matmul %80, %82, %cst_50 {dimension_numbers = #tpu.dot_dimension_numbers<[1], [0], [0], [1], [0, 0, 1, 1], [], []>} : vector<16x128xbf16>, vector<128x128xbf16>, vector<16x128xf32> -> vector<16x128xf32>
    %84 = arith.addf %79, %83 : vector<16x128xf32>
    %85 = vector.extract_strided_slice %75 {offsets = [2, 0], sizes = [16, 128], strides = [1, 1]} : vector<18x128xbf16> to vector<16x128xbf16>
    %c2_51 = arith.constant 2 : index
    %c0_52 = arith.constant 0 : index
    %c0_53 = arith.constant 0 : index
    %86 = vector.load %arg3[%c2_51, %c0_52, %c0_53] : memref<3x128x128xbf16, #tpu.memory_space<vmem>>, vector<1x128x128xbf16>
    %87 = vector.shape_cast %86 : vector<1x128x128xbf16> to vector<128x128xbf16>
    %cst_54 = arith.constant dense<0.000000e+00> : vector<16x128xf32>
    %88 = tpu.matmul %85, %87, %cst_54 {dimension_numbers = #tpu.dot_dimension_numbers<[1], [0], [0], [1], [0, 0, 1, 1], [], []>} : vector<16x128xbf16>, vector<128x128xbf16>, vector<16x128xf32> -> vector<16x128xf32>
    %89 = arith.addf %84, %88 : vector<16x128xf32>
    %90 = vector.broadcast %62 : vector<1x128xf32> to vector<16x128xf32>
    %91 = arith.mulf %37, %90 : vector<16x128xf32>
    %92 = vector.broadcast %65 : vector<1x128xf32> to vector<16x128xf32>
    %93 = arith.addf %91, %92 : vector<16x128xf32>
    %cst_55 = arith.constant 0.000000e+00 : f32
    %94 = vector.broadcast %cst_55 : f32 to vector<16x128xf32>
    %95 = arith.maximumf %93, %94 : vector<16x128xf32>
    %96 = arith.truncf %95 : vector<16x128xf32> to vector<16x128xbf16>
    %97 = vector.extract_strided_slice %96 {offsets = [1, 0], sizes = [1, 128], strides = [1, 1]} : vector<16x128xbf16> to vector<1x128xbf16>
    %98 = vector.extract_strided_slice %96 {offsets = [14, 0], sizes = [1, 128], strides = [1, 1]} : vector<16x128xbf16> to vector<1x128xbf16>
    %99 = tpu.concatenate %97, %96, %98 in 0 : vector<1x128xbf16>, vector<16x128xbf16>, vector<1x128xbf16> -> vector<18x128xbf16>
    %100 = vector.extract_strided_slice %99 {offsets = [0, 0], sizes = [16, 128], strides = [1, 1]} : vector<18x128xbf16> to vector<16x128xbf16>
    %c0_56 = arith.constant 0 : index
    %c0_57 = arith.constant 0 : index
    %c0_58 = arith.constant 0 : index
    %101 = vector.load %arg3[%c0_56, %c0_57, %c0_58] : memref<3x128x128xbf16, #tpu.memory_space<vmem>>, vector<1x128x128xbf16>
    %102 = vector.shape_cast %101 : vector<1x128x128xbf16> to vector<128x128xbf16>
    %cst_59 = arith.constant dense<0.000000e+00> : vector<16x128xf32>
    %103 = tpu.matmul %100, %102, %cst_59 {dimension_numbers = #tpu.dot_dimension_numbers<[1], [0], [0], [1], [0, 0, 1, 1], [], []>} : vector<16x128xbf16>, vector<128x128xbf16>, vector<16x128xf32> -> vector<16x128xf32>
    %104 = vector.extract_strided_slice %99 {offsets = [1, 0], sizes = [16, 128], strides = [1, 1]} : vector<18x128xbf16> to vector<16x128xbf16>
    %c1_60 = arith.constant 1 : index
    %c0_61 = arith.constant 0 : index
    %c0_62 = arith.constant 0 : index
    %105 = vector.load %arg3[%c1_60, %c0_61, %c0_62] : memref<3x128x128xbf16, #tpu.memory_space<vmem>>, vector<1x128x128xbf16>
    %106 = vector.shape_cast %105 : vector<1x128x128xbf16> to vector<128x128xbf16>
    %cst_63 = arith.constant dense<0.000000e+00> : vector<16x128xf32>
    %107 = tpu.matmul %104, %106, %cst_63 {dimension_numbers = #tpu.dot_dimension_numbers<[1], [0], [0], [1], [0, 0, 1, 1], [], []>} : vector<16x128xbf16>, vector<128x128xbf16>, vector<16x128xf32> -> vector<16x128xf32>
    %108 = arith.addf %103, %107 : vector<16x128xf32>
    %109 = vector.extract_strided_slice %99 {offsets = [2, 0], sizes = [16, 128], strides = [1, 1]} : vector<18x128xbf16> to vector<16x128xbf16>
    %c2_64 = arith.constant 2 : index
    %c0_65 = arith.constant 0 : index
    %c0_66 = arith.constant 0 : index
    %110 = vector.load %arg3[%c2_64, %c0_65, %c0_66] : memref<3x128x128xbf16, #tpu.memory_space<vmem>>, vector<1x128x128xbf16>
    %111 = vector.shape_cast %110 : vector<1x128x128xbf16> to vector<128x128xbf16>
    %cst_67 = arith.constant dense<0.000000e+00> : vector<16x128xf32>
    %112 = tpu.matmul %109, %111, %cst_67 {dimension_numbers = #tpu.dot_dimension_numbers<[1], [0], [0], [1], [0, 0, 1, 1], [], []>} : vector<16x128xbf16>, vector<128x128xbf16>, vector<16x128xf32> -> vector<16x128xf32>
    %113 = arith.addf %108, %112 : vector<16x128xf32>
    %cst_68 = arith.constant dense<0.000000e+00> : vector<128xf32>
    %114 = vector.multi_reduction <add>, %89, %cst_68 [0] : vector<16x128xf32> to vector<128xf32>
    %115 = vector.shape_cast %114 : vector<128xf32> to vector<1x128xf32>
    %116 = arith.mulf %89, %89 : vector<16x128xf32>
    %cst_69 = arith.constant dense<0.000000e+00> : vector<128xf32>
    %117 = vector.multi_reduction <add>, %116, %cst_69 [0] : vector<16x128xf32> to vector<128xf32>
    %118 = vector.shape_cast %117 : vector<128xf32> to vector<1x128xf32>
    %cst_70 = arith.constant dense<0.000000e+00> : vector<128xf32>
    %119 = vector.multi_reduction <add>, %113, %cst_70 [0] : vector<16x128xf32> to vector<128xf32>
    %120 = vector.shape_cast %119 : vector<128xf32> to vector<1x128xf32>
    %121 = arith.addf %115, %120 : vector<1x128xf32>
    %122 = arith.mulf %113, %113 : vector<16x128xf32>
    %cst_71 = arith.constant dense<0.000000e+00> : vector<128xf32>
    %123 = vector.multi_reduction <add>, %122, %cst_71 [0] : vector<16x128xf32> to vector<128xf32>
    %124 = vector.shape_cast %123 : vector<128xf32> to vector<1x128xf32>
    %125 = arith.addf %118, %124 : vector<1x128xf32>
    %c0_72 = arith.constant 0 : index
    %c0_73 = arith.constant 0 : index
    %126 = vector.load %arg4[%c0_72, %c0_73] : memref<128x128xf32, #tpu.memory_space<vmem>>, vector<128x128xf32>
    %cst_74 = arith.constant dense<0.000000e+00> : vector<1x128xf32>
    %127 = tpu.matmul %121, %126, %cst_74 {dimension_numbers = #tpu.dot_dimension_numbers<[1], [0], [0], [1], [0, 0, 1, 1], [], []>} : vector<1x128xf32>, vector<128x128xf32>, vector<1x128xf32> -> vector<1x128xf32>
    %c0_75 = arith.constant 0 : index
    %c0_76 = arith.constant 0 : index
    %128 = vector.load %arg4[%c0_75, %c0_76] : memref<128x128xf32, #tpu.memory_space<vmem>>, vector<128x128xf32>
    %cst_77 = arith.constant dense<0.000000e+00> : vector<1x128xf32>
    %129 = tpu.matmul %125, %128, %cst_77 {dimension_numbers = #tpu.dot_dimension_numbers<[1], [0], [0], [1], [0, 0, 1, 1], [], []>} : vector<1x128xf32>, vector<128x128xf32>, vector<1x128xf32> -> vector<1x128xf32>
    %130 = arith.mulf %127, %127 : vector<1x128xf32>
    %131 = arith.subf %129, %130 : vector<1x128xf32>
    %cst_78 = arith.constant 0.000000e+00 : f32
    %132 = vector.broadcast %cst_78 : f32 to vector<1x128xf32>
    %133 = arith.maximumf %131, %132 : vector<1x128xf32>
    %c0_79 = arith.constant 0 : index
    %c0_80 = arith.constant 0 : index
    %134 = vector.load %arg7[%c0_79, %c0_80] : memref<1x128xf32, #tpu.memory_space<vmem>>, vector<1x128xf32>
    %cst_81 = arith.constant 9.99999974E-6 : f32
    %135 = vector.broadcast %cst_81 : f32 to vector<1x128xf32>
    %136 = arith.addf %133, %135 : vector<1x128xf32>
    %137 = math.rsqrt %136 : vector<1x128xf32>
    %138 = arith.mulf %134, %137 : vector<1x128xf32>
    %c0_82 = arith.constant 0 : index
    %c0_83 = arith.constant 0 : index
    %139 = vector.load %arg8[%c0_82, %c0_83] : memref<1x128xf32, #tpu.memory_space<vmem>>, vector<1x128xf32>
    %140 = arith.mulf %127, %138 : vector<1x128xf32>
    %141 = arith.subf %139, %140 : vector<1x128xf32>
    %142 = vector.broadcast %138 : vector<1x128xf32> to vector<16x128xf32>
    %143 = arith.mulf %89, %142 : vector<16x128xf32>
    %144 = vector.broadcast %141 : vector<1x128xf32> to vector<16x128xf32>
    %145 = arith.addf %143, %144 : vector<16x128xf32>
    %cst_84 = arith.constant 0.000000e+00 : f32
    %146 = vector.broadcast %cst_84 : f32 to vector<16x128xf32>
    %147 = arith.maximumf %145, %146 : vector<16x128xf32>
    %c0_85 = arith.constant 0 : index
    %c0_86 = arith.constant 0 : index
    %c0_87 = arith.constant 0 : index
    %148 = vector.load %arg9[%c0_85, %c0_86, %c0_87] : memref<2x16x128xf32, #tpu.memory_space<vmem>>, vector<1x16x128xf32>
    %149 = vector.shape_cast %148 : vector<1x16x128xf32> to vector<16x128xf32>
    %150 = vector.shape_cast %147 : vector<16x128xf32> to vector<1x16x128xf32>
    tpu.vector_store %arg9[%c0_85, %c0_86, %c0_87], %150 {strides = array<i32>} : memref<2x16x128xf32, #tpu.memory_space<vmem>>, vector<1x16x128xf32>,
    %151 = vector.broadcast %138 : vector<1x128xf32> to vector<16x128xf32>
    %152 = arith.mulf %113, %151 : vector<16x128xf32>
    %153 = vector.broadcast %141 : vector<1x128xf32> to vector<16x128xf32>
    %154 = arith.addf %152, %153 : vector<16x128xf32>
    %cst_88 = arith.constant 0.000000e+00 : f32
    %155 = vector.broadcast %cst_88 : f32 to vector<16x128xf32>
    %156 = arith.maximumf %154, %155 : vector<16x128xf32>
    %c1_89 = arith.constant 1 : index
    %c0_90 = arith.constant 0 : index
    %c0_91 = arith.constant 0 : index
    %157 = vector.load %arg9[%c1_89, %c0_90, %c0_91] : memref<2x16x128xf32, #tpu.memory_space<vmem>>, vector<1x16x128xf32>
    %158 = vector.shape_cast %157 : vector<1x16x128xf32> to vector<16x128xf32>
    %159 = vector.shape_cast %156 : vector<16x128xf32> to vector<1x16x128xf32>
    tpu.vector_store %arg9[%c1_89, %c0_90, %c0_91], %159 {strides = array<i32>} : memref<2x16x128xf32, #tpu.memory_space<vmem>>, vector<1x16x128xf32>,
    return
  }
  func.func @transform_0(%arg0: i32) -> (i32, i32, i32) {
    %c0_i32 = arith.constant 0 : i32
    %c0_i32_0 = arith.constant 0 : i32
    %c0_i32_1 = arith.constant 0 : i32
    %c0_i32_2 = arith.constant 0 : i32
    return %c0_i32, %c0_i32_0, %c0_i32_1 : i32, i32, i32
  }
  func.func @transform_1(%arg0: i32) -> (i32, i32, i32) {
    %c0_i32 = arith.constant 0 : i32
    %c0_i32_0 = arith.constant 0 : i32
    %c0_i32_1 = arith.constant 0 : i32
    %c0_i32_2 = arith.constant 0 : i32
    return %c0_i32, %c0_i32_0, %c0_i32_1 : i32, i32, i32
  }
  func.func @transform_2(%arg0: i32) -> (i32, i32, i32) {
    %c0_i32 = arith.constant 0 : i32
    %c0_i32_0 = arith.constant 0 : i32
    %c0_i32_1 = arith.constant 0 : i32
    %c0_i32_2 = arith.constant 0 : i32
    return %c0_i32, %c0_i32_0, %c0_i32_1 : i32, i32, i32
  }
  func.func @transform_3(%arg0: i32) -> (i32, i32) {
    %c0_i32 = arith.constant 0 : i32
    %c0_i32_0 = arith.constant 0 : i32
    %c0_i32_1 = arith.constant 0 : i32
    return %c0_i32, %c0_i32_0 : i32, i32
  }
  func.func @transform_4(%arg0: i32) -> (i32, i32) {
    %c0_i32 = arith.constant 0 : i32
    %c0_i32_0 = arith.constant 0 : i32
    %c0_i32_1 = arith.constant 0 : i32
    return %c0_i32, %c0_i32_0 : i32, i32
  }
  func.func @transform_5(%arg0: i32) -> (i32, i32) {
    %c0_i32 = arith.constant 0 : i32
    %c0_i32_0 = arith.constant 0 : i32
    %c0_i32_1 = arith.constant 0 : i32
    return %c0_i32, %c0_i32_0 : i32, i32
  }
  func.func @transform_6(%arg0: i32) -> (i32, i32) {
    %c0_i32 = arith.constant 0 : i32
    %c0_i32_0 = arith.constant 0 : i32
    %c0_i32_1 = arith.constant 0 : i32
    return %c0_i32, %c0_i32_0 : i32, i32
  }
  func.func @transform_7(%arg0: i32) -> (i32, i32) {
    %c0_i32 = arith.constant 0 : i32
    %c0_i32_0 = arith.constant 0 : i32
    %c0_i32_1 = arith.constant 0 : i32
    return %c0_i32, %c0_i32_0 : i32, i32
  }
  func.func @transform_8(%arg0: i32) -> (i32, i32, i32) {
    %c0_i32 = arith.constant 0 : i32
    %c0_i32_0 = arith.constant 0 : i32
    %c0_i32_1 = arith.constant 0 : i32
    %c0_i32_2 = arith.constant 0 : i32
    return %c0_i32, %c0_i32_0, %c0_i32_1 : i32, i32, i32
  }
}

</mosaic_0001>

<llo_original>
// kernel: tile.33
$region0: #{tile.33}
  #allocation0 [shape = 's32[1]{0}', space=sflag, size = 0x4, scoped, tag = 'scoped memory for tile.33']
  %s0 = inlined_call_operand.vmem [shape: f32[8], index: 0, kind: input, shape index: {}]
  %s1 = inlined_call_operand.vmem [shape: f32[16,8], index: 1, kind: output, shape index: {}]
  // Predicated region
  $region2: #{tile.33} parent=0 // pred_check
    _
  $region3: #{tile.33} parent=0 // pred_check_branch
    %3 = sbr.rel (0) target = $region5
  $region4: #{tile.33} parent=0 // pred_region
    _
  $region5: #{tile.33} parent=0 // pred_fallthru
    _
  %v4 = vld [vmem:[%s0] ss:$0 sm:$0xff]
  %5 = vst [vmem:[%s1] sm:$0xff] %v4
  %s6 = scalar_lea.vmem %s1, 8
  %7 = vst [vmem:[%s6] sm:$0xff] %v4

// kernel: tile.34
$region0: #{tile.34}
  %s0 = inlined_call_operand.vmem [shape: f32[16,8], index: 0, kind: input, shape index: {}]
  %s1 = inlined_call_operand.vmem [shape: f32[1,128], index: 1, kind: output, shape index: {}]
  $region1: #{tile.34} parent=0
    #allocation0 [shape = 'u8[4096]{0}', space=vmem, size = 0x1000, scoped, tag = 'scoped mem for output reshape']
    %v2 = vld [vmem:[%s0] sm:$0x1]
    %vm3 = vcmask 64512
    %4 = vst.msk [vmem:[#allocation0] sm:$0x1] %vm3, %v2
    %s5 = scalar_lea.vmem %s0, 15
    %v6 = vld [vmem:[%s5] sm:$0x1]
    %7 = vrot.lane.b32.xlu0 %v6, 120
    %v8 = vpop.permute.xlu0 %7
    %vm9 = vcmask 1048512
    %10 = vst.msk [vmem:[#allocation0] sm:$0x1] %vm9, %v8
    %s11 = scalar_lea.vmem %s0, 14
    %v12 = vld [vmem:[%s11] sm:$0x1]
    %13 = vrot.lane.b32.xlu0 %v12, 112
    %v14 = vpop.permute.xlu0 %13
    %vm15 = vcmask 982912
    %16 = vst.msk [vmem:[#allocation0] sm:$0x1] %vm15, %v14
    %s17 = scalar_lea.vmem %s0, 13
    %v18 = vld [vmem:[%s17] sm:$0x1]
    %19 = vrot.lane.b32.xlu0 %v18, 104
    %v20 = vpop.permute.xlu0 %19
    %vm21 = vcmask 917312
    %22 = vst.msk [vmem:[#allocation0] sm:$0x1] %vm21, %v20
    %s23 = scalar_lea.vmem %s0, 12
    %v24 = vld [vmem:[%s23] sm:$0x1]
    %25 = vrot.lane.b32.xlu0 %v24, 96
    %v26 = vpop.permute.xlu0 %25
    %vm27 = vcmask 851712
    %28 = vst.msk [vmem:[#allocation0] sm:$0x1] %vm27, %v26
    %s29 = scalar_lea.vmem %s0, 11
    %v30 = vld [vmem:[%s29] sm:$0x1]
    %31 = vrot.lane.b32.xlu0 %v30, 88
    %v32 = vpop.permute.xlu0 %31
    %vm33 = vcmask 786112
    %34 = vst.msk [vmem:[#allocation0] sm:$0x1] %vm33, %v32
    %s35 = scalar_lea.vmem %s0, 10
    %v36 = vld [vmem:[%s35] sm:$0x1]
    %37 = vrot.lane.b32.xlu0 %v36, 80
    %v38 = vpop.permute.xlu0 %37
    %vm39 = vcmask 720512
    %40 = vst.msk [vmem:[#allocation0] sm:$0x1] %vm39, %v38
    %s41 = scalar_lea.vmem %s0, 9
    %v42 = vld [vmem:[%s41] sm:$0x1]
    %43 = vrot.lane.b32.xlu0 %v42, 72
    %v44 = vpop.permute.xlu0 %43
    %vm45 = vcmask 654912
    %46 = vst.msk [vmem:[#allocation0] sm:$0x1] %vm45, %v44
    %s47 = scalar_lea.vmem %s0, 8
    %v48 = vld [vmem:[%s47] sm:$0x1]
    %49 = vrot.lane.b32.xlu0 %v48, 64
    %v50 = vpop.permute.xlu0 %49
    %vm51 = vcmask 589312
    %52 = vst.msk [vmem:[#allocation0] sm:$0x1] %vm51, %v50
    %s53 = scalar_lea.vmem %s0, 7
    %v54 = vld [vmem:[%s53] sm:$0x1]
    %55 = vrot.lane.b32.xlu0 %v54, 56
    %v56 = vpop.permute.xlu0 %55
    %vm57 = vcmask 523712
    %58 = vst.msk [vmem:[#allocation0] sm:$0x1] %vm57, %v56
    %s59 = scalar_lea.vmem %s0, 6
    %v60 = vld [vmem:[%s59] sm:$0x1]
    %61 = vrot.lane.b32.xlu0 %v60, 48
    %v62 = vpop.permute.xlu0 %61
    %vm63 = vcmask 458112
    %64 = vst.msk [vmem:[#allocation0] sm:$0x1] %vm63, %v62
    %s65 = scalar_lea.vmem %s0, 5
    %v66 = vld [vmem:[%s65] sm:$0x1]
    %67 = vrot.lane.b32.xlu0 %v66, 40
    %v68 = vpop.permute.xlu0 %67
    %vm69 = vcmask 392512
    %70 = vst.msk [vmem:[#allocation0] sm:$0x1] %vm69, %v68
    %s71 = scalar_lea.vmem %s0, 4
    %v72 = vld [vmem:[%s71] sm:$0x1]
    %73 = vrot.lane.b32.xlu0 %v72, 32
    %v74 = vpop.permute.xlu0 %73
    %vm75 = vcmask 326912
    %76 = vst.msk [vmem:[#allocation0] sm:$0x1] %vm75, %v74
    %s77 = scalar_lea.vmem %s0, 3
    %v78 = vld [vmem:[%s77] sm:$0x1]
    %79 = vrot.lane.b32.xlu0 %v78, 24
    %v80 = vpop.permute.xlu0 %79
    %vm81 = vcmask 261312
    %82 = vst.msk [vmem:[#allocation0] sm:$0x1] %vm81, %v80
    %s83 = scalar_lea.vmem %s0, 2
    %v84 = vld [vmem:[%s83] sm:$0x1]
    %85 = vrot.lane.b32.xlu0 %v84, 16
    %v86 = vpop.permute.xlu0 %85
    %vm87 = vcmask 195712
    %88 = vst.msk [vmem:[#allocation0] sm:$0x1] %vm87, %v86
    %s89 = scalar_lea.vmem %s0, 1
    %v90 = vld [vmem:[%s89] sm:$0x1]
    %91 = vrot.lane.b32.xlu0 %v90, 8
    %v92 = vpop.permute.xlu0 %91
    %vm93 = vcmask 130112
    %94 = vst.msk [vmem:[#allocation0] sm:$0x1] %vm93, %v92
    %s96 = ssub.s32 2, 1
    %v97 = vld [vmem:[#allocation0] sm:%s96]
    %s99 = ssub.s32 2, 1
    %100 = vst [vmem:[%s1] sm:%s99] %v97

// kernel: inconv_forward.1
$region0: #{inconv_forward.1}
  #allocation0 [shape = 'u32[]', space=smem, size = 0x4, offset = 0x4, fixed_abs, tag = 'smem constant byte address 0x4 - core index']
  #allocation1 [shape = 'u32[72,128]{1,0:T(1,128)}', space=vmem, size = 0x9000, scoped, tag = 'internal scratch']
  %s0 = inlined_call_operand.vmem [shape: bf16[2,16,64], index: 0, kind: input, shape index: {}]
  %s1 = inlined_call_operand.vmem [shape: bf16[3,64,128], index: 1, kind: input, shape index: {}]
  %s2 = inlined_call_operand.vmem [shape: bf16[3,128,128], index: 2, kind: input, shape index: {}]
  %s3 = inlined_call_operand.vmem [shape: f32[128,128], index: 3, kind: input, shape index: {}]
  %s4 = inlined_call_operand.vmem [shape: f32[1,128], index: 4, kind: input, shape index: {}]
  %s5 = inlined_call_operand.vmem [shape: f32[1,128], index: 5, kind: input, shape index: {}]
  %s6 = inlined_call_operand.vmem [shape: f32[1,128], index: 6, kind: input, shape index: {}]
  %s7 = inlined_call_operand.vmem [shape: f32[1,128], index: 7, kind: input, shape index: {}]
  %s8 = inlined_call_operand.vmem [shape: f32[2,16,128], index: 8, kind: output, shape index: {}]
  %s9 = sld [smem:[#allocation0]]
  $region42: #{inconv_forward.1} parent=0
    _
  %s11 = ssub.s32 1, %s9
  %s12 = scalar_select 0, %s11, %s9
  // Predicated region
  $region2: #{inconv_forward.1} parent=0 // pred_check
    _
  $region3: #{inconv_forward.1} parent=0 // pred_check_branch
    %14 = sbr.rel (0) target = $region5
  $region4: #{inconv_forward.1} parent=0 // pred_region
    _
  $region5: #{inconv_forward.1} parent=0 // pred_fallthru
    _
  // Predicated region
  $region6: #{inconv_forward.1} parent=0 // pred_check
    _
  $region7: #{inconv_forward.1} parent=0 // pred_check_branch
    %16 = sbr.rel (0) target = $region9
  $region8: #{inconv_forward.1} parent=0 // pred_region
    _
  $region9: #{inconv_forward.1} parent=0 // pred_fallthru
    _
  // Predicated region
  $region10: #{inconv_forward.1} parent=0 // pred_check
    _
  $region11: #{inconv_forward.1} parent=0 // pred_check_branch
    %18 = sbr.rel (0) target = $region13
  $region12: #{inconv_forward.1} parent=0 // pred_region
    _
  $region13: #{inconv_forward.1} parent=0 // pred_fallthru
    _
  // Predicated region
  $region14: #{inconv_forward.1} parent=0 // pred_check
    _
  $region15: #{inconv_forward.1} parent=0 // pred_check_branch
    %20 = sbr.rel (0) target = $region17
  $region16: #{inconv_forward.1} parent=0 // pred_region
    _
  $region17: #{inconv_forward.1} parent=0 // pred_fallthru
    _
  // Predicated region
  $region18: #{inconv_forward.1} parent=0 // pred_check
    _
  $region19: #{inconv_forward.1} parent=0 // pred_check_branch
    %22 = sbr.rel (0) target = $region21
  $region20: #{inconv_forward.1} parent=0 // pred_region
    _
  $region21: #{inconv_forward.1} parent=0 // pred_fallthru
    _
  // Predicated region
  $region22: #{inconv_forward.1} parent=0 // pred_check
    _
  $region23: #{inconv_forward.1} parent=0 // pred_check_branch
    %24 = sbr.rel (0) target = $region25
  $region24: #{inconv_forward.1} parent=0 // pred_region
    _
  $region25: #{inconv_forward.1} parent=0 // pred_fallthru
    _
  // Predicated region
  $region26: #{inconv_forward.1} parent=0 // pred_check
    _
  $region27: #{inconv_forward.1} parent=0 // pred_check_branch
    %26 = sbr.rel (0) target = $region29
  $region28: #{inconv_forward.1} parent=0 // pred_region
    _
  $region29: #{inconv_forward.1} parent=0 // pred_fallthru
    _
  // Predicated region
  $region30: #{inconv_forward.1} parent=0 // pred_check
    _
  $region31: #{inconv_forward.1} parent=0 // pred_check_branch
    %28 = sbr.rel (0) target = $region33
  $region32: #{inconv_forward.1} parent=0 // pred_region
    _
  $region33: #{inconv_forward.1} parent=0 // pred_fallthru
    _
  %v30 = vld [vmem:[%s0] sm:$0xf]
  %v31 = vld [vmem:[%s0 + $0x4] sm:$0xf]
  %v33 = vunpack.c.l.b16 %v30
  %v34 = vpack.c.b16 %v33, %v33
  %v36 = vshrl.u32 %v34, 16
  %v40 = vunpack.c.l.b16 %v31
  %v41 = vpack.c.b16 %v40, %v33
  %v43 = vshrl.u32 %v41, 16
  %v45 = vrot.slane %v43, 7
  %v46 = vshll.u32 %v41, 16
  %v48 = vor.u32 %v45, %v46
  %v51 = vpack.c.b16 %v40, %v40
  %v53 = vshll.u32 %v51, 16
  %v55 = vrot.slane %v53, 3
  %vm57 = vcmask 1040384
  %vm58 = vsmask.f32 256
  %vm59 = vmand %vm57, %vm58
  %v60 = vsel %vm59, %v36, %v48
  %v61 = vsel %vm59, %v45, %v55
  %v62 = vld [vmem:[%s1] sm:$0xf]
  %v63 = vld [vmem:[%s1 + $0x4] sm:$0xf]
  %v64 = vld [vmem:[%s1 + $0x8] sm:$0xf]
  %v65 = vld [vmem:[%s1 + $0xc] sm:$0xf]
  %v66 = vld [vmem:[%s1 + $0x10] sm:$0xf]
  %v67 = vld [vmem:[%s1 + $0x14] sm:$0xf]
  %v68 = vld [vmem:[%s1 + $0x18] sm:$0xf]
  %v69 = vld [vmem:[%s1 + $0x1c] sm:$0xf]
  %s70 = scalar_lea.vmem %s1, 32
  %v71 = vld [vmem:[%s70] sm:$0xf]
  %v72 = vld [vmem:[%s70 + $0x4] sm:$0xf]
  %v73 = vld [vmem:[%s70 + $0x8] sm:$0xf]
  %v74 = vld [vmem:[%s70 + $0xc] sm:$0xf]
  %v75 = vld [vmem:[%s70 + $0x10] sm:$0xf]
  %v76 = vld [vmem:[%s70 + $0x14] sm:$0xf]
  %v77 = vld [vmem:[%s70 + $0x18] sm:$0xf]
  %v78 = vld [vmem:[%s70 + $0x1c] sm:$0xf]
  %vm79 = vsmask.f32 7424
  %v81 = vshrl.u32 %v60, 16
  %v83 = vshll.u32 %v60, 16
  %v85 = vrot.slane %v83, 1
  %v86 = vor.u32 %v81, %v85
  %v88 = vshll.u32 %v61, 16
  %v90 = vrot.slane %v88, 1
  %v91 = vsel %vm79, %v86, %v90
  %v100 = vunpack.c.l.b16 %v71
  %v101 = vunpack.c.l.b16 %v72
  %v102 = vunpack.c.l.b16 %v73
  %v103 = vunpack.c.l.b16 %v74
  %v104 = vunpack.c.l.b16 %v75
  %v105 = vunpack.c.l.b16 %v76
  %v106 = vunpack.c.l.b16 %v77
  %v107 = vunpack.c.l.b16 %v78
  %v108 = vpack.c.b16 %v101, %v100
  %v109 = vpack.c.b16 %v103, %v102
  %v110 = vpack.c.b16 %v105, %v104
  %v111 = vpack.c.b16 %v107, %v106
  %vm116 = vcmask 523264
  %v118 = vsel %vm116, %v91, 0
  %120 = vmatpush.bf16.msra.mxu0 0
  %121 = vmatpush.bf16.msra.mxu0 0
  %122 = vmatpush.bf16.msra.mxu0 0
  %123 = vmatpush.bf16.msra.mxu0 0
  %124 = vmatpush.bf16.msra.mxu0 %v111
  %125 = vmatpush.bf16.msra.mxu0 %v110
  %126 = vmatpush.bf16.msra.mxu0 %v109
  %127 = vmatpush.bf16.msra.mxu0 %v108
  %128 = vmatmul.bf16.gmra.mxu0 %v118
  %v129 = vpop.f32.mrf.mxu0
  %v130 = vadd.f32 0.0, %v129
  %v131 = vpop.f32.mrf.mxu0
  %v132 = vadd.f32 0.0, %v131
  %133 = vdwg.mxu0
  %v142 = vunpack.c.l.b16 %v62
  %v143 = vunpack.c.l.b16 %v63
  %v144 = vunpack.c.l.b16 %v64
  %v145 = vunpack.c.l.b16 %v65
  %v146 = vunpack.c.l.b16 %v66
  %v147 = vunpack.c.l.b16 %v67
  %v148 = vunpack.c.l.b16 %v68
  %v149 = vunpack.c.l.b16 %v69
  %v150 = vpack.c.b16 %v143, %v142
  %v151 = vpack.c.b16 %v145, %v144
  %v152 = vpack.c.b16 %v147, %v146
  %v153 = vpack.c.b16 %v149, %v148
  %v158 = vsel %vm116, %v60, 0
  %160 = vmatpush.bf16.msra.mxu0 0
  %161 = vmatpush.bf16.msra.mxu0 0
  %162 = vmatpush.bf16.msra.mxu0 0
  %163 = vmatpush.bf16.msra.mxu0 0
  %164 = vmatpush.bf16.msra.mxu0 %v153
  %165 = vmatpush.bf16.msra.mxu0 %v152
  %166 = vmatpush.bf16.msra.mxu0 %v151
  %167 = vmatpush.bf16.msra.mxu0 %v150
  %168 = vmatmul.bf16.gmra.mxu0 %v158
  %v169 = vpop.f32.mrf.mxu0
  %v170 = vadd.f32 %v130, %v169
  %v171 = vpop.f32.mrf.mxu0
  %v172 = vadd.f32 %v132, %v171
  %173 = vdwg.mxu0
  %s174 = scalar_lea.vmem %s1, 64
  %v175 = vld [vmem:[%s174] sm:$0xf]
  %v176 = vld [vmem:[%s174 + $0x4] sm:$0xf]
  %v177 = vld [vmem:[%s174 + $0x8] sm:$0xf]
  %v178 = vld [vmem:[%s174 + $0xc] sm:$0xf]
  %v179 = vld [vmem:[%s174 + $0x10] sm:$0xf]
  %v180 = vld [vmem:[%s174 + $0x14] sm:$0xf]
  %v181 = vld [vmem:[%s174 + $0x18] sm:$0xf]
  %v182 = vld [vmem:[%s174 + $0x1c] sm:$0xf]
  %vm185 = vcmask 1046528
  %v186 = vrot.slane %v60, 1
  %v187 = vrot.slane %v61, 1
  %v188 = vsel %vm185, %v186, %v187
  %v197 = vunpack.c.l.b16 %v175
  %v198 = vunpack.c.l.b16 %v176
  %v199 = vunpack.c.l.b16 %v177
  %v200 = vunpack.c.l.b16 %v178
  %v201 = vunpack.c.l.b16 %v179
  %v202 = vunpack.c.l.b16 %v180
  %v203 = vunpack.c.l.b16 %v181
  %v204 = vunpack.c.l.b16 %v182
  %v205 = vpack.c.b16 %v198, %v197
  %v206 = vpack.c.b16 %v200, %v199
  %v207 = vpack.c.b16 %v202, %v201
  %v208 = vpack.c.b16 %v204, %v203
  %v214 = vsel %vm116, %v188, 0
  %216 = vmatpush.bf16.msra.mxu0 0
  %217 = vmatpush.bf16.msra.mxu0 0
  %218 = vmatpush.bf16.msra.mxu0 0
  %219 = vmatpush.bf16.msra.mxu0 0
  %220 = vmatpush.bf16.msra.mxu0 %v208
  %221 = vmatpush.bf16.msra.mxu0 %v207
  %222 = vmatpush.bf16.msra.mxu0 %v206
  %223 = vmatpush.bf16.msra.mxu0 %v205
  %224 = vmatmul.bf16.gmra.mxu0 %v214
  %v225 = vpop.f32.mrf.mxu0
  %v226 = vadd.f32 0.0, %v225
  %v227 = vpop.f32.mrf.mxu0
  %v228 = vadd.f32 0.0, %v227
  %229 = vdwg.mxu0
  %v230 = vadd.f32 %v170, %v226
  %v231 = vadd.f32 %v172, %v228
  %s232 = scalar_lea.vmem %s0, 8
  %v233 = vld [vmem:[%s232] sm:$0xf]
  %v234 = vld [vmem:[%s232 + $0x4] sm:$0xf]
  %v236 = vunpack.c.l.b16 %v233
  %v237 = vpack.c.b16 %v236, %v236
  %v239 = vshrl.u32 %v237, 16
  %v243 = vunpack.c.l.b16 %v234
  %v244 = vpack.c.b16 %v243, %v236
  %v246 = vshrl.u32 %v244, 16
  %v248 = vrot.slane %v246, 7
  %v249 = vshll.u32 %v244, 16
  %v251 = vor.u32 %v248, %v249
  %v254 = vpack.c.b16 %v243, %v243
  %v256 = vshll.u32 %v254, 16
  %v258 = vrot.slane %v256, 3
  %v260 = vsel %vm59, %v239, %v251
  %v261 = vsel %vm59, %v248, %v258
  %v263 = vshrl.u32 %v260, 16
  %v265 = vshll.u32 %v260, 16
  %v267 = vrot.slane %v265, 1
  %v268 = vor.u32 %v263, %v267
  %v270 = vshll.u32 %v261, 16
  %v272 = vrot.slane %v270, 1
  %v273 = vsel %vm79, %v268, %v272
  %v275 = vsel %vm116, %v273, 0
  %277 = vmatpush.bf16.msra.mxu0 0
  %278 = vmatpush.bf16.msra.mxu0 0
  %279 = vmatpush.bf16.msra.mxu0 0
  %280 = vmatpush.bf16.msra.mxu0 0
  %281 = vmatpush.bf16.msra.mxu0 %v111
  %282 = vmatpush.bf16.msra.mxu0 %v110
  %283 = vmatpush.bf16.msra.mxu0 %v109
  %284 = vmatpush.bf16.msra.mxu0 %v108
  %285 = vmatmul.bf16.gmra.mxu0 %v275
  %v286 = vpop.f32.mrf.mxu0
  %v287 = vadd.f32 0.0, %v286
  %v288 = vpop.f32.mrf.mxu0
  %v289 = vadd.f32 0.0, %v288
  %290 = vdwg.mxu0
  %v291 = vsel %vm116, %v260, 0
  %293 = vmatpush.bf16.msra.mxu0 0
  %294 = vmatpush.bf16.msra.mxu0 0
  %295 = vmatpush.bf16.msra.mxu0 0
  %296 = vmatpush.bf16.msra.mxu0 0
  %297 = vmatpush.bf16.msra.mxu0 %v153
  %298 = vmatpush.bf16.msra.mxu0 %v152
  %299 = vmatpush.bf16.msra.mxu0 %v151
  %300 = vmatpush.bf16.msra.mxu0 %v150
  %301 = vmatmul.bf16.gmra.mxu0 %v291
  %v302 = vpop.f32.mrf.mxu0
  %v303 = vadd.f32 %v287, %v302
  %v304 = vpop.f32.mrf.mxu0
  %v305 = vadd.f32 %v289, %v304
  %306 = vdwg.mxu0
  %v309 = vrot.slane %v260, 1
  %v310 = vrot.slane %v261, 1
  %v311 = vsel %vm185, %v309, %v310
  %v313 = vsel %vm116, %v311, 0
  %315 = vmatpush.bf16.msra.mxu0 0
  %316 = vmatpush.bf16.msra.mxu0 0
  %317 = vmatpush.bf16.msra.mxu0 0
  %318 = vmatpush.bf16.msra.mxu0 0
  %319 = vmatpush.bf16.msra.mxu0 %v208
  %320 = vmatpush.bf16.msra.mxu0 %v207
  %321 = vmatpush.bf16.msra.mxu0 %v206
  %322 = vmatpush.bf16.msra.mxu0 %v205
  %323 = vmatmul.bf16.gmra.mxu0 %v313
  %v324 = vpop.f32.mrf.mxu0
  %v325 = vadd.f32 0.0, %v324
  %v326 = vpop.f32.mrf.mxu0
  %v327 = vadd.f32 0.0, %v326
  %328 = vdwg.mxu0
  %v329 = vadd.f32 %v303, %v325
  %v330 = vadd.f32 %v305, %v327
  %v331 = vadd.f32 %v230, %v231
  %v332 = vrot.slane %v331, 4
  %v333 = vadd.f32 %v331, %v332
  %v334 = vrot.slane %v333, 2
  %v335 = vadd.f32 %v333, %v334
  %v336 = vrot.slane %v335, 1
  %v337 = vadd.f32 %v335, %v336
  %v338 = vmul.f32 %v230, %v230
  %v339 = vmul.f32 %v231, %v231
  %v340 = vadd.f32 %v338, %v339
  %v341 = vrot.slane %v340, 4
  %v342 = vadd.f32 %v340, %v341
  %v343 = vrot.slane %v342, 2
  %v344 = vadd.f32 %v342, %v343
  %v345 = vrot.slane %v344, 1
  %v346 = vadd.f32 %v344, %v345
  %v347 = vadd.f32 %v329, %v330
  %v348 = vrot.slane %v347, 4
  %v349 = vadd.f32 %v347, %v348
  %v350 = vrot.slane %v349, 2
  %v351 = vadd.f32 %v349, %v350
  %v352 = vrot.slane %v351, 1
  %v353 = vadd.f32 %v351, %v352
  %v354 = vadd.f32 %v337, %v353
  %v355 = vmul.f32 %v329, %v329
  %v356 = vmul.f32 %v330, %v330
  %v357 = vadd.f32 %v355, %v356
  %v358 = vrot.slane %v357, 4
  %v359 = vadd.f32 %v357, %v358
  %v360 = vrot.slane %v359, 2
  %v361 = vadd.f32 %v359, %v360
  %v362 = vrot.slane %v361, 1
  %v363 = vadd.f32 %v361, %v362
  %v364 = vadd.f32 %v346, %v363
  %v365 = vld [vmem:[%s3] sm:$0xff]
  %v366 = vld [vmem:[%s3 + $0x8] sm:$0xff]
  %v367 = vld [vmem:[%s3 + $0x10] sm:$0xff]
  %v368 = vld [vmem:[%s3 + $0x18] sm:$0xff]
  %v369 = vld [vmem:[%s3 + $0x20] sm:$0xff]
  %v370 = vld [vmem:[%s3 + $0x28] sm:$0xff]
  %v371 = vld [vmem:[%s3 + $0x30] sm:$0xff]
  %v372 = vld [vmem:[%s3 + $0x38] sm:$0xff]
  %v373 = vld [vmem:[%s3 + $0x40] sm:$0xff]
  %v374 = vld [vmem:[%s3 + $0x48] sm:$0xff]
  %v375 = vld [vmem:[%s3 + $0x50] sm:$0xff]
  %v376 = vld [vmem:[%s3 + $0x58] sm:$0xff]
  %v377 = vld [vmem:[%s3 + $0x60] sm:$0xff]
  %v378 = vld [vmem:[%s3 + $0x68] sm:$0xff]
  %v379 = vld [vmem:[%s3 + $0x70] sm:$0xff]
  %v380 = vld [vmem:[%s3 + $0x78] sm:$0xff]
  %381 = vmatpush.msra.mxu0 %v380
  %382 = vmatpush.msra.mxu0 %v379
  %383 = vmatpush.msra.mxu0 %v378
  %384 = vmatpush.msra.mxu0 %v377
  %385 = vmatpush.msra.mxu0 %v376
  %386 = vmatpush.msra.mxu0 %v375
  %387 = vmatpush.msra.mxu0 %v374
  %388 = vmatpush.msra.mxu0 %v373
  %389 = vmatpush.msra.mxu0 %v372
  %390 = vmatpush.msra.mxu0 %v371
  %391 = vmatpush.msra.mxu0 %v370
  %392 = vmatpush.msra.mxu0 %v369
  %393 = vmatpush.msra.mxu0 %v368
  %394 = vmatpush.msra.mxu0 %v367
  %395 = vmatpush.msra.mxu0 %v366
  %396 = vmatpush.msra.mxu0 %v365
  %397 = vmatmul.f32.gmra.mxu0 %v354
  %v398 = vpop.f32.mrf.mxu0
  %v399 = vadd.f32 0.0, %v398
  %400 = vdwg.mxu0
  %401 = vmatpush.msra.mxu0 %v380
  %402 = vmatpush.msra.mxu0 %v379
  %403 = vmatpush.msra.mxu0 %v378
  %404 = vmatpush.msra.mxu0 %v377
  %405 = vmatpush.msra.mxu0 %v376
  %406 = vmatpush.msra.mxu0 %v375
  %407 = vmatpush.msra.mxu0 %v374
  %408 = vmatpush.msra.mxu0 %v373
  %409 = vmatpush.msra.mxu0 %v372
  %410 = vmatpush.msra.mxu0 %v371
  %411 = vmatpush.msra.mxu0 %v370
  %412 = vmatpush.msra.mxu0 %v369
  %413 = vmatpush.msra.mxu0 %v368
  %414 = vmatpush.msra.mxu0 %v367
  %415 = vmatpush.msra.mxu0 %v366
  %416 = vmatpush.msra.mxu0 %v365
  %417 = vmatmul.f32.gmra.mxu0 %v364
  %v418 = vpop.f32.mrf.mxu0
  %v419 = vadd.f32 0.0, %v418
  %420 = vdwg.mxu0
  %v421 = vmul.f32 %v399, %v399
  %v422 = vsub.f32 %v419, %v421
  %v423 = vmax.f32 %v422, 0.0
  %v424 = vld [vmem:[%s4] sm:$0x1]
  %v425 = vadd.f32 %v423, 1e-05
  %v426 = vrsqrt.pop %v425
  %v427 = vmul.f32 %v426, %v425
  %v428 = vmul.f32 %v427, %v426
  %v429 = vmul.f32 0.5, %v428
  %v430 = vsub.f32 1.5, %v429
  %v431 = vmul.f32 %v426, %v430
  %vm432 = vweird.f32 %v425
  %vm433 = vweird.f32 %v426
  %vm434 = vmor %vm432, %vm433
  %v435 = vsel %vm434, %v426, %v431
  %v436 = vmul.f32 %v424, %v435
  %v437 = vld [vmem:[%s5] sm:$0x1]
  %v438 = vmul.f32 %v399, %v436
  %v439 = vsub.f32 %v437, %v438
  %v441 = vperm.slane %v436, 0
  %v443 = vmul.f32 %v230, %v441
  %v444 = vmul.f32 %v231, %v441
  %v446 = vperm.slane %v439, 0
  %v448 = vadd.f32 %v443, %v446
  %v449 = vadd.f32 %v444, %v446
  %v450 = vmax.f32 %v448, 0.0
  %v451 = vmax.f32 %v449, 0.0
  %v452 = vpack.c.bf16 %v450, %v450
  %v453 = vpack.c.bf16 %v451, %v451
  %v455 = vunpack.c.l.b16 %v452
  %v456 = vpack.c.b16 %v455, %v455
  %v458 = vshrl.u32 %v456, 16
  %v462 = vunpack.c.l.b16 %v453
  %v463 = vpack.c.b16 %v462, %v455
  %v465 = vshrl.u32 %v463, 16
  %v467 = vrot.slane %v465, 7
  %v468 = vshll.u32 %v463, 16
  %v470 = vor.u32 %v467, %v468
  %v473 = vpack.c.b16 %v462, %v462
  %v475 = vshll.u32 %v473, 16
  %v477 = vrot.slane %v475, 3
  %v479 = vsel %vm59, %v458, %v470
  %v480 = vsel %vm59, %v467, %v477
  %v481 = vld [vmem:[%s2] sm:$0xf]
  %v482 = vld [vmem:[%s2 + $0x4] sm:$0xf]
  %v483 = vld [vmem:[%s2 + $0x8] sm:$0xf]
  %v484 = vld [vmem:[%s2 + $0xc] sm:$0xf]
  %v485 = vld [vmem:[%s2 + $0x10] sm:$0xf]
  %v486 = vld [vmem:[%s2 + $0x14] sm:$0xf]
  %v487 = vld [vmem:[%s2 + $0x18] sm:$0xf]
  %v488 = vld [vmem:[%s2 + $0x1c] sm:$0xf]
  %v489 = vld [vmem:[%s2 + $0x20] sm:$0xf]
  %v490 = vld [vmem:[%s2 + $0x24] sm:$0xf]
  %v491 = vld [vmem:[%s2 + $0x28] sm:$0xf]
  %v492 = vld [vmem:[%s2 + $0x2c] sm:$0xf]
  %v493 = vld [vmem:[%s2 + $0x30] sm:$0xf]
  %v494 = vld [vmem:[%s2 + $0x34] sm:$0xf]
  %v495 = vld [vmem:[%s2 + $0x38] sm:$0xf]
  %v496 = vld [vmem:[%s2 + $0x3c] sm:$0xf]
  %s497 = scalar_lea.vmem %s2, 64
  %v498 = vld [vmem:[%s497] sm:$0xf]
  %v499 = vld [vmem:[%s497 + $0x4] sm:$0xf]
  %v500 = vld [vmem:[%s497 + $0x8] sm:$0xf]
  %v501 = vld [vmem:[%s497 + $0xc] sm:$0xf]
  %v502 = vld [vmem:[%s497 + $0x10] sm:$0xf]
  %v503 = vld [vmem:[%s497 + $0x14] sm:$0xf]
  %v504 = vld [vmem:[%s497 + $0x18] sm:$0xf]
  %v505 = vld [vmem:[%s497 + $0x1c] sm:$0xf]
  %v506 = vld [vmem:[%s497 + $0x20] sm:$0xf]
  %v507 = vld [vmem:[%s497 + $0x24] sm:$0xf]
  %v508 = vld [vmem:[%s497 + $0x28] sm:$0xf]
  %v509 = vld [vmem:[%s497 + $0x2c] sm:$0xf]
  %v510 = vld [vmem:[%s497 + $0x30] sm:$0xf]
  %v511 = vld [vmem:[%s497 + $0x34] sm:$0xf]
  %v512 = vld [vmem:[%s497 + $0x38] sm:$0xf]
  %v513 = vld [vmem:[%s497 + $0x3c] sm:$0xf]
  %v515 = vshrl.u32 %v479, 16
  %v517 = vshll.u32 %v479, 16
  %v519 = vrot.slane %v517, 1
  %v520 = vor.u32 %v515, %v519
  %v522 = vshll.u32 %v480, 16
  %v524 = vrot.slane %v522, 1
  %v525 = vsel %vm79, %v520, %v524
  %v543 = vunpack.c.l.b16 %v498
  %v544 = vunpack.c.l.b16 %v499
  %v545 = vunpack.c.l.b16 %v500
  %v546 = vunpack.c.l.b16 %v501
  %v547 = vunpack.c.l.b16 %v502
  %v548 = vunpack.c.l.b16 %v503
  %v549 = vunpack.c.l.b16 %v504
  %v550 = vunpack.c.l.b16 %v505
  %v551 = vunpack.c.l.b16 %v506
  %v552 = vunpack.c.l.b16 %v507
  %v553 = vunpack.c.l.b16 %v508
  %v554 = vunpack.c.l.b16 %v509
  %v555 = vunpack.c.l.b16 %v510
  %v556 = vunpack.c.l.b16 %v511
  %v557 = vunpack.c.l.b16 %v512
  %v558 = vunpack.c.l.b16 %v513
  %v559 = vpack.c.b16 %v544, %v543
  %v560 = vpack.c.b16 %v546, %v545
  %v561 = vpack.c.b16 %v548, %v547
  %v562 = vpack.c.b16 %v550, %v549
  %v563 = vpack.c.b16 %v552, %v551
  %v564 = vpack.c.b16 %v554, %v553
  %v565 = vpack.c.b16 %v556, %v555
  %v566 = vpack.c.b16 %v558, %v557
  %575 = vmatpush.bf16.msra.mxu0 %v566
  %576 = vmatpush.bf16.msra.mxu0 %v565
  %577 = vmatpush.bf16.msra.mxu0 %v564
  %578 = vmatpush.bf16.msra.mxu0 %v563
  %579 = vmatpush.bf16.msra.mxu0 %v562
  %580 = vmatpush.bf16.msra.mxu0 %v561
  %581 = vmatpush.bf16.msra.mxu0 %v560
  %582 = vmatpush.bf16.msra.mxu0 %v559
  %583 = vmatmul.bf16.gmra.mxu0 %v525
  %v584 = vpop.f32.mrf.mxu0
  %v585 = vadd.f32 0.0, %v584
  %v586 = vpop.f32.mrf.mxu0
  %v587 = vadd.f32 0.0, %v586
  %588 = vdwg.mxu0
  %v605 = vunpack.c.l.b16 %v481
  %v606 = vunpack.c.l.b16 %v482
  %v607 = vunpack.c.l.b16 %v483
  %v608 = vunpack.c.l.b16 %v484
  %v609 = vunpack.c.l.b16 %v485
  %v610 = vunpack.c.l.b16 %v486
  %v611 = vunpack.c.l.b16 %v487
  %v612 = vunpack.c.l.b16 %v488
  %v613 = vunpack.c.l.b16 %v489
  %v614 = vunpack.c.l.b16 %v490
  %v615 = vunpack.c.l.b16 %v491
  %v616 = vunpack.c.l.b16 %v492
  %v617 = vunpack.c.l.b16 %v493
  %v618 = vunpack.c.l.b16 %v494
  %v619 = vunpack.c.l.b16 %v495
  %v620 = vunpack.c.l.b16 %v496
  %v621 = vpack.c.b16 %v606, %v605
  %v622 = vpack.c.b16 %v608, %v607
  %v623 = vpack.c.b16 %v610, %v609
  %v624 = vpack.c.b16 %v612, %v611
  %v625 = vpack.c.b16 %v614, %v613
  %v626 = vpack.c.b16 %v616, %v615
  %v627 = vpack.c.b16 %v618, %v617
  %v628 = vpack.c.b16 %v620, %v619
  %637 = vmatpush.bf16.msra.mxu0 %v628
  %638 = vmatpush.bf16.msra.mxu0 %v627
  %639 = vmatpush.bf16.msra.mxu0 %v626
  %640 = vmatpush.bf16.msra.mxu0 %v625
  %641 = vmatpush.bf16.msra.mxu0 %v624
  %642 = vmatpush.bf16.msra.mxu0 %v623
  %643 = vmatpush.bf16.msra.mxu0 %v622
  %644 = vmatpush.bf16.msra.mxu0 %v621
  %645 = vmatmul.bf16.gmra.mxu0 %v479
  %v646 = vpop.f32.mrf.mxu0
  %v647 = vadd.f32 %v585, %v646
  %v648 = vpop.f32.mrf.mxu0
  %v649 = vadd.f32 %v587, %v648
  %650 = vdwg.mxu0
  %s651 = scalar_lea.vmem %s2, 128
  %v652 = vld [vmem:[%s651] sm:$0xf]
  %v653 = vld [vmem:[%s651 + $0x4] sm:$0xf]
  %v654 = vld [vmem:[%s651 + $0x8] sm:$0xf]
  %v655 = vld [vmem:[%s651 + $0xc] sm:$0xf]
  %v656 = vld [vmem:[%s651 + $0x10] sm:$0xf]
  %v657 = vld [vmem:[%s651 + $0x14] sm:$0xf]
  %v658 = vld [vmem:[%s651 + $0x18] sm:$0xf]
  %v659 = vld [vmem:[%s651 + $0x1c] sm:$0xf]
  %v660 = vld [vmem:[%s651 + $0x20] sm:$0xf]
  %v661 = vld [vmem:[%s651 + $0x24] sm:$0xf]
  %v662 = vld [vmem:[%s651 + $0x28] sm:$0xf]
  %v663 = vld [vmem:[%s651 + $0x2c] sm:$0xf]
  %v664 = vld [vmem:[%s651 + $0x30] sm:$0xf]
  %v665 = vld [vmem:[%s651 + $0x34] sm:$0xf]
  %v666 = vld [vmem:[%s651 + $0x38] sm:$0xf]
  %v667 = vld [vmem:[%s651 + $0x3c] sm:$0xf]
  %v670 = vrot.slane %v479, 1
  %v671 = vrot.slane %v480, 1
  %v672 = vsel %vm185, %v670, %v671
  %v690 = vunpack.c.l.b16 %v652
  %v691 = vunpack.c.l.b16 %v653
  %v692 = vunpack.c.l.b16 %v654
  %v693 = vunpack.c.l.b16 %v655
  %v694 = vunpack.c.l.b16 %v656
  %v695 = vunpack.c.l.b16 %v657
  %v696 = vunpack.c.l.b16 %v658
  %v697 = vunpack.c.l.b16 %v659
  %v698 = vunpack.c.l.b16 %v660
  %v699 = vunpack.c.l.b16 %v661
  %v700 = vunpack.c.l.b16 %v662
  %v701 = vunpack.c.l.b16 %v663
  %v702 = vunpack.c.l.b16 %v664
  %v703 = vunpack.c.l.b16 %v665
  %v704 = vunpack.c.l.b16 %v666
  %v705 = vunpack.c.l.b16 %v667
  %v706 = vpack.c.b16 %v691, %v690
  %v707 = vpack.c.b16 %v693, %v692
  %v708 = vpack.c.b16 %v695, %v694
  %v709 = vpack.c.b16 %v697, %v696
  %v710 = vpack.c.b16 %v699, %v698
  %v711 = vpack.c.b16 %v701, %v700
  %v712 = vpack.c.b16 %v703, %v702
  %v713 = vpack.c.b16 %v705, %v704
  %722 = vmatpush.bf16.msra.mxu0 %v713
  %723 = vmatpush.bf16.msra.mxu0 %v712
  %724 = vmatpush.bf16.msra.mxu0 %v711
  %725 = vmatpush.bf16.msra.mxu0 %v710
  %726 = vmatpush.bf16.msra.mxu0 %v709
  %727 = vmatpush.bf16.msra.mxu0 %v708
  %728 = vmatpush.bf16.msra.mxu0 %v707
  %729 = vmatpush.bf16.msra.mxu0 %v706
  %730 = vmatmul.bf16.gmra.mxu0 %v672
  %v731 = vpop.f32.mrf.mxu0
  %v732 = vadd.f32 0.0, %v731
  %v733 = vpop.f32.mrf.mxu0
  %v734 = vadd.f32 0.0, %v733
  %735 = vdwg.mxu0
  %v736 = vadd.f32 %v647, %v732
  %v737 = vadd.f32 %v649, %v734
  %v738 = vmul.f32 %v329, %v441
  %v739 = vmul.f32 %v330, %v441
  %v740 = vadd.f32 %v738, %v446
  %v741 = vadd.f32 %v739, %v446
  %v742 = vmax.f32 %v740, 0.0
  %v743 = vmax.f32 %v741, 0.0
  %v744 = vpack.c.bf16 %v742, %v742
  %v745 = vpack.c.bf16 %v743, %v743
  %v747 = vunpack.c.l.b16 %v744
  %v748 = vpack.c.b16 %v747, %v747
  %v750 = vshrl.u32 %v748, 16
  %v754 = vunpack.c.l.b16 %v745
  %v755 = vpack.c.b16 %v754, %v747
  %v757 = vshrl.u32 %v755, 16
  %v759 = vrot.slane %v757, 7
  %v760 = vshll.u32 %v755, 16
  %v762 = vor.u32 %v759, %v760
  %v765 = vpack.c.b16 %v754, %v754
  %v767 = vshll.u32 %v765, 16
  %v769 = vrot.slane %v767, 3
  %v771 = vsel %vm59, %v750, %v762
  %v772 = vsel %vm59, %v759, %v769
  %v774 = vshrl.u32 %v771, 16
  %v776 = vshll.u32 %v771, 16
  %v778 = vrot.slane %v776, 1
  %v779 = vor.u32 %v774, %v778
  %v781 = vshll.u32 %v772, 16
  %v783 = vrot.slane %v781, 1
  %v784 = vsel %vm79, %v779, %v783
  %786 = vmatpush.bf16.msra.mxu0 %v566
  %787 = vmatpush.bf16.msra.mxu0 %v565
  %788 = vmatpush.bf16.msra.mxu0 %v564
  %789 = vmatpush.bf16.msra.mxu0 %v563
  %790 = vmatpush.bf16.msra.mxu0 %v562
  %791 = vmatpush.bf16.msra.mxu0 %v561
  %792 = vmatpush.bf16.msra.mxu0 %v560
  %793 = vmatpush.bf16.msra.mxu0 %v559
  %794 = vmatmul.bf16.gmra.mxu0 %v784
  %v795 = vpop.f32.mrf.mxu0
  %v796 = vadd.f32 0.0, %v795
  %v797 = vpop.f32.mrf.mxu0
  %v798 = vadd.f32 0.0, %v797
  %799 = vdwg.mxu0
  %800 = vmatpush.bf16.msra.mxu0 %v628
  %801 = vmatpush.bf16.msra.mxu0 %v627
  %802 = vmatpush.bf16.msra.mxu0 %v626
  %803 = vmatpush.bf16.msra.mxu0 %v625
  %804 = vmatpush.bf16.msra.mxu0 %v624
  %805 = vmatpush.bf16.msra.mxu0 %v623
  %806 = vmatpush.bf16.msra.mxu0 %v622
  %807 = vmatpush.bf16.msra.mxu0 %v621
  %808 = vmatmul.bf16.gmra.mxu0 %v771
  %v809 = vpop.f32.mrf.mxu0
  %v810 = vadd.f32 %v796, %v809
  %v811 = vpop.f32.mrf.mxu0
  %v812 = vadd.f32 %v798, %v811
  %813 = vdwg.mxu0
  %v816 = vrot.slane %v771, 1
  %v817 = vrot.slane %v772, 1
  %v818 = vsel %vm185, %v816, %v817
  %820 = vmatpush.bf16.msra.mxu0 %v713
  %821 = vmatpush.bf16.msra.mxu0 %v712
  %822 = vmatpush.bf16.msra.mxu0 %v711
  %823 = vmatpush.bf16.msra.mxu0 %v710
  %824 = vmatpush.bf16.msra.mxu0 %v709
  %825 = vmatpush.bf16.msra.mxu0 %v708
  %826 = vmatpush.bf16.msra.mxu0 %v707
  %827 = vmatpush.bf16.msra.mxu0 %v706
  %828 = vmatmul.bf16.gmra.mxu0 %v818
  %v829 = vpop.f32.mrf.mxu0
  %v830 = vadd.f32 0.0, %v829
  %v831 = vpop.f32.mrf.mxu0
  %v832 = vadd.f32 0.0, %v831
  %833 = vdwg.mxu0
  %v834 = vadd.f32 %v810, %v830
  %v835 = vadd.f32 %v812, %v832
  %v836 = vadd.f32 %v736, %v737
  %v837 = vrot.slane %v836, 4
  %v838 = vadd.f32 %v836, %v837
  %v839 = vrot.slane %v838, 2
  %v840 = vadd.f32 %v838, %v839
  %v841 = vrot.slane %v840, 1
  %v842 = vadd.f32 %v840, %v841
  %v843 = vmul.f32 %v736, %v736
  %v844 = vmul.f32 %v737, %v737
  %v845 = vadd.f32 %v843, %v844
  %v846 = vrot.slane %v845, 4
  %v847 = vadd.f32 %v845, %v846
  %v848 = vrot.slane %v847, 2
  %v849 = vadd.f32 %v847, %v848
  %v850 = vrot.slane %v849, 1
  %v851 = vadd.f32 %v849, %v850
  %v852 = vadd.f32 %v834, %v835
  %v853 = vrot.slane %v852, 4
  %v854 = vadd.f32 %v852, %v853
  %v855 = vrot.slane %v854, 2
  %v856 = vadd.f32 %v854, %v855
  %v857 = vrot.slane %v856, 1
  %v858 = vadd.f32 %v856, %v857
  %v859 = vadd.f32 %v842, %v858
  %v860 = vmul.f32 %v834, %v834
  %v861 = vmul.f32 %v835, %v835
  %v862 = vadd.f32 %v860, %v861
  %v863 = vrot.slane %v862, 4
  %v864 = vadd.f32 %v862, %v863
  %v865 = vrot.slane %v864, 2
  %v866 = vadd.f32 %v864, %v865
  %v867 = vrot.slane %v866, 1
  %v868 = vadd.f32 %v866, %v867
  %v869 = vadd.f32 %v851, %v868
  %870 = vmatpush.msra.mxu0 %v380
  %871 = vmatpush.msra.mxu0 %v379
  %872 = vmatpush.msra.mxu0 %v378
  %873 = vmatpush.msra.mxu0 %v377
  %874 = vmatpush.msra.mxu0 %v376
  %875 = vmatpush.msra.mxu0 %v375
  %876 = vmatpush.msra.mxu0 %v374
  %877 = vmatpush.msra.mxu0 %v373
  %878 = vmatpush.msra.mxu0 %v372
  %879 = vmatpush.msra.mxu0 %v371
  %880 = vmatpush.msra.mxu0 %v370
  %881 = vmatpush.msra.mxu0 %v369
  %882 = vmatpush.msra.mxu0 %v368
  %883 = vmatpush.msra.mxu0 %v367
  %884 = vmatpush.msra.mxu0 %v366
  %885 = vmatpush.msra.mxu0 %v365
  %886 = vmatmul.f32.gmra.mxu0 %v859
  %v887 = vpop.f32.mrf.mxu0
  %v888 = vadd.f32 0.0, %v887
  %889 = vdwg.mxu0
  %890 = vmatpush.msra.mxu0 %v380
  %891 = vmatpush.msra.mxu0 %v379
  %892 = vmatpush.msra.mxu0 %v378
  %893 = vmatpush.msra.mxu0 %v377
  %894 = vmatpush.msra.mxu0 %v376
  %895 = vmatpush.msra.mxu0 %v375
  %896 = vmatpush.msra.mxu0 %v374
  %897 = vmatpush.msra.mxu0 %v373
  %898 = vmatpush.msra.mxu0 %v372
  %899 = vmatpush.msra.mxu0 %v371
  %900 = vmatpush.msra.mxu0 %v370
  %901 = vmatpush.msra.mxu0 %v369
  %902 = vmatpush.msra.mxu0 %v368
  %903 = vmatpush.msra.mxu0 %v367
  %904 = vmatpush.msra.mxu0 %v366
  %905 = vmatpush.msra.mxu0 %v365
  %906 = vmatmul.f32.gmra.mxu0 %v869
  %v907 = vpop.f32.mrf.mxu0
  %v908 = vadd.f32 0.0, %v907
  %909 = vdwg.mxu0
  %v910 = vmul.f32 %v888, %v888
  %v911 = vsub.f32 %v908, %v910
  %v912 = vmax.f32 %v911, 0.0
  %v913 = vld [vmem:[%s6] sm:$0x1]
  %v914 = vadd.f32 %v912, 1e-05
  %v915 = vrsqrt.pop %v914
  %v916 = vmul.f32 %v915, %v914
  %v917 = vmul.f32 %v916, %v915
  %v918 = vmul.f32 0.5, %v917
  %v919 = vsub.f32 1.5, %v918
  %v920 = vmul.f32 %v915, %v919
  %vm921 = vweird.f32 %v914
  %vm922 = vweird.f32 %v915
  %vm923 = vmor %vm921, %vm922
  %v924 = vsel %vm923, %v915, %v920
  %v925 = vmul.f32 %v913, %v924
  %v926 = vld [vmem:[%s7] sm:$0x1]
  %v927 = vmul.f32 %v888, %v925
  %v928 = vsub.f32 %v926, %v927
  %v930 = vperm.slane %v925, 0
  %v932 = vmul.f32 %v736, %v930
  %v933 = vmul.f32 %v737, %v930
  %v935 = vperm.slane %v928, 0
  %v937 = vadd.f32 %v932, %v935
  %v938 = vadd.f32 %v933, %v935
  %v939 = vmax.f32 %v937, 0.0
  %v940 = vmax.f32 %v938, 0.0
  %941 = vst [vmem:[%s8] sm:$0xff] %v939
  %942 = vst [vmem:[%s8 + $0x8] sm:$0xff] %v940
  %v943 = vmul.f32 %v834, %v930
  %v944 = vmul.f32 %v835, %v930
  %v945 = vadd.f32 %v943, %v935
  %v946 = vadd.f32 %v944, %v935
  %v947 = vmax.f32 %v945, 0.0
  %v948 = vmax.f32 %v946, 0.0
  %s949 = scalar_lea.vmem %s8, 16
  %950 = vst [vmem:[%s949] sm:$0xff] %v947
  %951 = vst [vmem:[%s949 + $0x8] sm:$0xff] %v948
  // Predicated region
  $region34: #{inconv_forward.1} parent=0 // pred_check
    _
  $region35: #{inconv_forward.1} parent=0 // pred_check_branch
    %953 = sbr.rel (0) target = $region37
  $region36: #{inconv_forward.1} parent=0 // pred_region
    _
  $region37: #{inconv_forward.1} parent=0 // pred_fallthru
    _
  // Predicated region
  $region38: #{inconv_forward.1} parent=0 // pred_check
    _
  $region39: #{inconv_forward.1} parent=0 // pred_check_branch
    %955 = sbr.rel (0) target = $region41
  $region40: #{inconv_forward.1} parent=0 // pred_region
    _
  $region41: #{inconv_forward.1} parent=0 // pred_fallthru
    _

</llo_original>
